<compile_context>
chip_gen: v6e
topology: v6e:2x2x1
jax: 0.10.0
libtpu: 0.0.40
codegen_flags: <defaults>
</compile_context>

<pallas_src>
import jax
import jax.numpy as jnp
from jax import lax
from jax.experimental import pallas as pl
from jax.experimental.pallas import tpu as pltpu

BN_EPS = 1e-5
_LANE = 128
_SUBLANE = 8
_TM_TARGET = 512                    # row-tile target (~85% of HBM roofline at 512)
_TK_TARGET = 1024                   # K-tile target: adj read once; longer rows = better DMA
_VMEM_BUDGET = 20 * 1024 * 1024     # per-step working-set target before tiles shrink
_VMEM_LIMIT = 32 * 1024 * 1024      # scoped limit: safe on v5e/v6e (128 MiB) and v7x (64 MiB)


def _round_up(v, m):
    return (v + m - 1) // m * m


def _choose_tiles(n):
    """Return (n_pad, tm, tk): n_pad divisible by tm and tk, tk a multiple of 128.

    Pads N to a 256-multiple (<=127 extra zero rows/cols) so awkward N never forces
    degenerate 128x128 tiles (1 KiB DMA rows, 16x more grid steps)."""
    n128 = _round_up(n, _LANE)
    if n128 <= _TM_TARGET:
        return n128, n128, n128
    n_pad = _round_up(n128, 256)
    tm = _TM_TARGET if n_pad % _TM_TARGET == 0 else 256
    if n_pad % _TK_TARGET == 0:
        tk = _TK_TARGET
    elif n_pad % _TM_TARGET == 0:
        tk = _TM_TARGET
    else:
        tk = 256
    return n_pad, tm, tk


def _shrink_for_vmem(n_pad, tm, tk, feat_w, f_out_p, f_in_p, apply_proj):
    """Shrink tk (then tm) so the per-step VMEM working set stays under budget."""

    def est(tm_, tk_):
        b = 2 * tm_ * tk_ * 2            # adj tile, double-buffered, bf16
        b += 2 * tk_ * feat_w * 2        # feature tile, double-buffered, bf16
        b += tm_ * feat_w * 4            # f32 accumulator scratch
        b += 2 * tm_ * f_out_p * 2       # h output tile, double-buffered, bf16
        if apply_proj:
            b += 2 * f_in_p * f_out_p * 2   # resident W^T, bf16
        return b

    while est(tm, tk) > _VMEM_BUDGET and tk >= 512 and n_pad % (tk // 2) == 0:
        tk //= 2
    while est(tm, tk) > _VMEM_BUDGET and tm >= 256 and n_pad % (tm // 2) == 0:
        tm //= 2
    # TODO(synk): for very large F_in x F_out the resident W^T alone can exceed the
    # v7x budget; add an f_out grid axis to tile W^T / h if that regime matters.
    return tm, tk


def _make_agg_kernel(apply_proj, f_out_p):
    """h = (adj @ feat) [@ W^T], plus per-row-tile sum(h) / sum(h*h) for BatchNorm."""

    def body(adj_ref, feat_ref, wt_ref, h_ref, psum_ref, pssq_ref, acc_ref):
        # Grid reads at top level only (pl.program_id inside pl.when bodies does not
        # lower in interpret mode and is what broke the previous version).
        k = pl.program_id(1)
        last_k = pl.num_programs(1) - 1

        @pl.when(k == 0)
        def _init():
            acc_ref[...] = jnp.zeros_like(acc_ref)

        # Stream bf16 adj tiles against the bf16 feature tile; accumulate in f32.
        acc_ref[...] += jnp.dot(adj_ref[...], feat_ref[...],
                                preferred_element_type=jnp.float32)

        @pl.when(k == last_k)
        def _finalize():
            if apply_proj:
                # bf16 x bf16 on the MXU; accuracy already bounded by the bf16 adj@x stream.
                h = jnp.dot(acc_ref[...].astype(jnp.bfloat16), wt_ref[...],
                            preferred_element_type=jnp.float32)
            else:
                h = acc_ref[...]
            h_ref[...] = h.astype(h_ref.dtype)

            # Partial BN statistics for this row tile. Zero-padded rows of adj yield
            # exactly-zero rows of h (no bias is added), so no row masking is needed;
            # the epilogue divides by the true N.
            s = jnp.sum(h, axis=0, keepdims=True)             # (1, f_out_p)
            ss = jnp.sum(h * h, axis=0, keepdims=True)        # (1, f_out_p)
            sub = lax.broadcasted_iota(jnp.int32, (_SUBLANE, f_out_p), 0)
            psum_ref[...] = jnp.where(sub == 0, s, 0.0)       # sum lives in sublane 0
            pssq_ref[...] = jnp.where(sub == 0, ss, 0.0)

    if apply_proj:
        return body

    def body_no_proj(adj_ref, feat_ref, h_ref, psum_ref, pssq_ref, acc_ref):
        body(adj_ref, feat_ref, None, h_ref, psum_ref, pssq_ref, acc_ref)

    return body_no_proj


def _proj_kernel(x_ref, wt_ref, xw_ref):
    # xw = x @ W^T (bf16 x bf16 on the MXU); used when F_out < F_in so the big
    # adj matmul streams the narrower feature matrix.
    xw_ref[...] = jnp.dot(x_ref[...], wt_ref[...],
                          preferred_element_type=jnp.float32).astype(xw_ref.dtype)


def _bn_kernel(scale_ref, shift_ref, h_ref, out_ref):
    # Pure lane-dense VPU FMA: stats already folded into scale/shift.
    h = h_ref[...].astype(jnp.float32)
    out_ref[...] = (h * scale_ref[...] + shift_ref[...]).astype(out_ref.dtype)


def gcn_layer(x, adj, weight, bias, gamma, beta):
    """x: [N, F_in], adj: [N, N], weight: [F_out, F_in], bias/gamma/beta: [F_out]."""
    del bias  # exactly cancelled by BatchNorm's mean subtraction; final output unchanged
    n, f_in = x.shape
    f_out = weight.shape[0]

    f_in_p = _round_up(f_in, _LANE)
    f_out_p = _round_up(f_out, _LANE)
    n_p, tm, tk = _choose_tiles(n)

    f32, bf16 = jnp.float32, jnp.bfloat16

    # Matmul order: dominant cost is N^2 * width(feat) -> stream the narrower features.
    pre_project = f_out_p < f_in_p
    apply_proj = not pre_project
    feat_w = f_out_p if pre_project else f_in_p

    tm, tk = _shrink_for_vmem(n_p, tm, tk, feat_w, f_out_p, f_in_p, apply_proj)
    # v7x megacore: give both TensorCores at least one row tile when possible.
    if n_p // tm < 2 and tm >= 256 and n_p % (tm // 2) == 0:
        tm //= 2
    nrt, nkt = n_p // tm, n_p // tk

    # MXU streaming operands in bf16 (halves adj/x/W HBM bytes); accumulation stays f32.
    adj_p = jnp.pad(jnp.asarray(adj, f32), ((0, n_p - n), (0, n_p - n))).astype(bf16)
    x_p = jnp.pad(jnp.asarray(x, f32), ((0, n_p - n), (0, f_in_p - f_in))).astype(bf16)
    wt_p = jnp.pad(jnp.asarray(weight, f32).T,
                   ((0, f_in_p - f_in), (0, f_out_p - f_out))).astype(bf16)
    g_p = jnp.pad(jnp.asarray(gamma, f32).reshape(1, -1), ((0, 0), (0, f_out_p - f_out)))
    be_p = jnp.pad(jnp.asarray(beta, f32).reshape(1, -1), ((0, 0), (0, f_out_p - f_out)))

    if pre_project:
        feat = pl.pallas_call(
            _proj_kernel,
            out_shape=jax.ShapeDtypeStruct((n_p, f_out_p), bf16),
            grid_spec=pltpu.PrefetchScalarGridSpec(
                num_scalar_prefetch=0,
                grid=(nrt,),
                in_specs=[pl.BlockSpec((tm, f_in_p), lambda i: (i, 0)),
                          pl.BlockSpec((f_in_p, f_out_p), lambda i: (0, 0))],
                out_specs=pl.BlockSpec((tm, f_out_p), lambda i: (i, 0)),
            ),
            compiler_params=pltpu.CompilerParams(
                dimension_semantics=("parallel",),
                vmem_limit_bytes=_VMEM_LIMIT),
        )(x_p, wt_p)
    else:
        feat = x_p

    # W^T is only passed (and held resident in VMEM) when the in-kernel projection runs.
    agg_inputs = [adj_p, feat]
    agg_in_specs = [
        pl.BlockSpec((tm, tk), lambda i, k: (i, k)),            # adj tile
        pl.BlockSpec((tk, feat_w), lambda i, k: (k, 0)),        # feature tile
    ]
    if apply_proj:
        agg_inputs.append(wt_p)
        agg_in_specs.append(pl.BlockSpec((f_in_p, f_out_p), lambda i, k: (0, 0)))

    flops = 2 * n_p * n_p * feat_w + (2 * n_p * f_in_p * f_out_p if apply_proj else 0)
    bytes_accessed = (adj_p.size * 2 + nrt * feat.size * 2          # feat re-fetched per row tile
                      + n_p * f_out_p * 2                           # h writeback (bf16)
                      + 2 * nrt * _SUBLANE * f_out_p * 4
                      + (wt_p.size * 2 if apply_proj else 0))
    cost = pl.CostEstimate(flops=flops, transcendentals=0, bytes_accessed=bytes_accessed)

    h, psum, pssq = pl.pallas_call(
        _make_agg_kernel(apply_proj, f_out_p),
        out_shape=[
            jax.ShapeDtypeStruct((n_p, f_out_p), bf16),                 # h (bf16 intermediate)
            jax.ShapeDtypeStruct((nrt * _SUBLANE, f_out_p), f32),       # partial sum(h)
            jax.ShapeDtypeStruct((nrt * _SUBLANE, f_out_p), f32),       # partial sum(h*h)
        ],
        grid_spec=pltpu.PrefetchScalarGridSpec(
            num_scalar_prefetch=0,
            grid=(nrt, nkt),
            in_specs=agg_in_specs,
            out_specs=[
                pl.BlockSpec((tm, f_out_p), lambda i, k: (i, 0)),
                pl.BlockSpec((_SUBLANE, f_out_p), lambda i, k: (i, 0)),
                pl.BlockSpec((_SUBLANE, f_out_p), lambda i, k: (i, 0)),
            ],
            scratch_shapes=[pltpu.VMEM((tm, feat_w), f32)],             # adj@feat accumulator
        ),
        compiler_params=pltpu.CompilerParams(
            dimension_semantics=("parallel", "arbitrary"),
            vmem_limit_bytes=_VMEM_LIMIT),
        cost_estimate=cost,
    )(*agg_inputs)

    # Tiny epilogue: fold the partial sums into fused BN scale/shift once (training-mode
    # BN, biased variance, eps=1e-5), so the BN kernel is a pure memory-bound FMA.
    inv_n = 1.0 / float(n)
    mean = jnp.sum(psum, axis=0, keepdims=True) * inv_n
    ex2 = jnp.sum(pssq, axis=0, keepdims=True) * inv_n
    var = jnp.maximum(ex2 - mean * mean, 0.0)
    scale = g_p * lax.rsqrt(var + BN_EPS)          # (1, f_out_p)
    shift = be_p - mean * scale                    # (1, f_out_p)

    out_p = pl.pallas_call(
        _bn_kernel,
        out_shape=jax.ShapeDtypeStruct((n_p, f_out_p), f32),
        grid_spec=pltpu.PrefetchScalarGridSpec(
            num_scalar_prefetch=0,
            grid=(nrt,),
            in_specs=[
                pl.BlockSpec((1, f_out_p), lambda i: (0, 0)),   # fused scale (resident)
                pl.BlockSpec((1, f_out_p), lambda i: (0, 0)),   # fused shift (resident)
                pl.BlockSpec((tm, f_out_p), lambda i: (i, 0)),  # h tile (bf16)
            ],
            out_specs=pl.BlockSpec((tm, f_out_p), lambda i: (i, 0)),
        ),
        compiler_params=pltpu.CompilerParams(
            dimension_semantics=("parallel",),
            vmem_limit_bytes=_VMEM_LIMIT),
    )(scale, shift, h)

    return out_p[:n, :f_out]


def gcn_layer_ref(x, adj, weight, bias, gamma, beta):
    """Pure-JAX f32 reference mirroring the PyTorch forward (training-mode BN)."""
    h = (adj @ x) @ weight.T + bias
    mean = jnp.mean(h, axis=0, keepdims=True)
    var = jnp.mean((h - mean) ** 2, axis=0, keepdims=True)
    return (h - mean) / jnp.sqrt(var + BN_EPS) * gamma + beta


if __name__ == "__main__":
    # Small, module-consistent shapes: N nodes, in_features -> out_features.
    N, F_IN, F_OUT = 64, 16, 32

    key = jax.random.PRNGKey(0)
    k_x, k_adj, k_w, k_b = jax.random.split(key, 4)

    x = jax.random.normal(k_x, (N, F_IN), dtype=jnp.float32)

    # Deterministic "sparse-ish" adjacency, densified (spmm == dense matmul here).
    adj_raw = jax.random.uniform(k_adj, (N, N), dtype=jnp.float32)
    adj = jnp.where(adj_raw > 0.8, adj_raw, 0.0) + jnp.eye(N, dtype=jnp.float32)

    # nn.Linear-style deterministic init (uniform in +/- 1/sqrt(F_IN)).
    bound = 1.0 / (F_IN ** 0.5)
    weight = jax.random.uniform(k_w, (F_OUT, F_IN), minval=-bound, maxval=bound, dtype=jnp.float32)
    bias = jax.random.uniform(k_b, (F_OUT,), minval=-bound, maxval=bound, dtype=jnp.float32)

    # nn.BatchNorm1d default init.
    gamma = jnp.ones((F_OUT,), dtype=jnp.float32)
    beta = jnp.zeros((F_OUT,), dtype=jnp.float32)

    out = jax.jit(gcn_layer)(x, adj, weight, bias, gamma, beta)
    jax.block_until_ready(out)

    ref = gcn_layer_ref(x, adj, weight, bias, gamma, beta)
    assert out.shape == (N, F_OUT)
    max_err = float(jnp.max(jnp.abs(out - ref)))
    # bf16 MXU streaming operands + bf16 intermediate h -> loosened tolerance vs the
    # all-f32 reference.
    assert jnp.allclose(out, ref, atol=5e-2, rtol=5e-2), f"mismatch vs reference (max err {max_err})"

    print("KERNEL_OK")
</pallas_src>

<mosaic_0001>
module attributes {stable_mosaic.version = 11 : i64} {
  func.func @body(%arg0: i32, %arg1: i32, %arg2: memref<128x128xbf16, #tpu.memory_space<vmem>>, %arg3: memref<128x128xbf16, #tpu.memory_space<vmem>>, %arg4: memref<128x128xbf16, #tpu.memory_space<vmem>>, %arg5: memref<128x128xbf16, #tpu.memory_space<vmem>>, %arg6: memref<8x128xf32, #tpu.memory_space<vmem>>, %arg7: memref<8x128xf32, #tpu.memory_space<vmem>>, %arg8: memref<128x128xf32, #tpu.memory_space<vmem>>) attributes {dimension_semantics = [#tpu.dimension_semantics<parallel>, #tpu.dimension_semantics<arbitrary>], iteration_bounds = array<i64: 1, 1>, scalar_prefetch = 0 : i64, scratch_operands = 1 : i64, tpu.core_type = #tpu.core_type<tc>, window_params = [{transform_indices = @transform_0, window_bounds = array<i64: 128, 128>}, {transform_indices = @transform_1, window_bounds = array<i64: 128, 128>}, {pipeline_mode = #tpu.pipeline_mode<synchronous>, transform_indices = @transform_2, window_bounds = array<i64: 128, 128>}, {transform_indices = @transform_3, window_bounds = array<i64: 128, 128>}, {transform_indices = @transform_4, window_bounds = array<i64: 8, 128>}, {transform_indices = @transform_5, window_bounds = array<i64: 8, 128>}]} {
    %c0_i32 = arith.constant 0 : i32
    %0 = arith.cmpi eq, %arg1, %c0_i32 : i32
    %1 = arith.extui %0 : i1 to i32
    %c0_i32_0 = arith.constant 0 : i32
    %2 = arith.cmpi ne, %1, %c0_i32_0 : i32
    scf.if %2 {
      %cst_10 = arith.constant 0.000000e+00 : f32
      %12 = vector.broadcast %cst_10 : f32 to vector<128x128xf32>
      %c0_11 = arith.constant 0 : index
      %c0_12 = arith.constant 0 : index
      %13 = vector.load %arg8[%c0_11, %c0_12] : memref<128x128xf32, #tpu.memory_space<vmem>>, vector<128x128xf32>
      tpu.vector_store %arg8[%c0_11, %c0_12], %12 {strides = array<i32>} : memref<128x128xf32, #tpu.memory_space<vmem>>, vector<128x128xf32>,
    } else {
    }
    %c0 = arith.constant 0 : index
    %c0_1 = arith.constant 0 : index
    %3 = vector.load %arg8[%c0, %c0_1] : memref<128x128xf32, #tpu.memory_space<vmem>>, vector<128x128xf32>
    %c0_2 = arith.constant 0 : index
    %c0_3 = arith.constant 0 : index
    %4 = vector.load %arg2[%c0_2, %c0_3] : memref<128x128xbf16, #tpu.memory_space<vmem>>, vector<128x128xbf16>
    %c0_4 = arith.constant 0 : index
    %c0_5 = arith.constant 0 : index
    %5 = vector.load %arg3[%c0_4, %c0_5] : memref<128x128xbf16, #tpu.memory_space<vmem>>, vector<128x128xbf16>
    %cst = arith.constant dense<0.000000e+00> : vector<128x128xf32>
    %6 = tpu.matmul %4, %5, %cst {dimension_numbers = #tpu.dot_dimension_numbers<[1], [0], [0], [1], [0, 0, 1, 1], [], []>} : vector<128x128xbf16>, vector<128x128xbf16>, vector<128x128xf32> -> vector<128x128xf32>
    %7 = arith.addf %3, %6 : vector<128x128xf32>
    %c0_6 = arith.constant 0 : index
    %c0_7 = arith.constant 0 : index
    %8 = vector.load %arg8[%c0_6, %c0_7] : memref<128x128xf32, #tpu.memory_space<vmem>>, vector<128x128xf32>
    tpu.vector_store %arg8[%c0_6, %c0_7], %7 {strides = array<i32>} : memref<128x128xf32, #tpu.memory_space<vmem>>, vector<128x128xf32>,
    %c0_i32_8 = arith.constant 0 : i32
    %9 = arith.cmpi eq, %arg1, %c0_i32_8 : i32
    %10 = arith.extui %9 : i1 to i32
    %c0_i32_9 = arith.constant 0 : i32
    %11 = arith.cmpi ne, %10, %c0_i32_9 : i32
    scf.if %11 {
      %c0_10 = arith.constant 0 : index
      %c0_11 = arith.constant 0 : index
      %12 = vector.load %arg8[%c0_10, %c0_11] : memref<128x128xf32, #tpu.memory_space<vmem>>, vector<128x128xf32>
      %13 = arith.truncf %12 : vector<128x128xf32> to vector<128x128xbf16>
      %c0_12 = arith.constant 0 : index
      %c0_13 = arith.constant 0 : index
      %14 = vector.load %arg4[%c0_12, %c0_13] : memref<128x128xbf16, #tpu.memory_space<vmem>>, vector<128x128xbf16>
      %cst_14 = arith.constant dense<0.000000e+00> : vector<128x128xf32>
      %15 = tpu.matmul %13, %14, %cst_14 {dimension_numbers = #tpu.dot_dimension_numbers<[1], [0], [0], [1], [0, 0, 1, 1], [], []>} : vector<128x128xbf16>, vector<128x128xbf16>, vector<128x128xf32> -> vector<128x128xf32>
      %16 = arith.truncf %15 : vector<128x128xf32> to vector<128x128xbf16>
      %c0_15 = arith.constant 0 : index
      %c0_16 = arith.constant 0 : index
      %17 = vector.load %arg5[%c0_15, %c0_16] : memref<128x128xbf16, #tpu.memory_space<vmem>>, vector<128x128xbf16>
      tpu.vector_store %arg5[%c0_15, %c0_16], %16 {strides = array<i32>} : memref<128x128xbf16, #tpu.memory_space<vmem>>, vector<128x128xbf16>,
      %cst_17 = arith.constant dense<0.000000e+00> : vector<128xf32>
      %18 = vector.multi_reduction <add>, %15, %cst_17 [0] : vector<128x128xf32> to vector<128xf32>
      %19 = vector.shape_cast %18 : vector<128xf32> to vector<1x128xf32>
      %20 = arith.mulf %15, %15 : vector<128x128xf32>
      %cst_18 = arith.constant dense<0.000000e+00> : vector<128xf32>
      %21 = vector.multi_reduction <add>, %20, %cst_18 [0] : vector<128x128xf32> to vector<128xf32>
      %22 = vector.shape_cast %21 : vector<128xf32> to vector<1x128xf32>
      %23 = tpu.iota {dimensions = array<i32: 0>} : vector<8x128xi32>
      %c0_i32_19 = arith.constant 0 : i32
      %24 = vector.broadcast %c0_i32_19 : i32 to vector<8x128xi32>
      %25 = arith.cmpi eq, %23, %24 : vector<8x128xi32>
      %cst_20 = arith.constant 0.000000e+00 : f32
      %26 = vector.shape_cast %19 : vector<1x128xf32> to vector<1x128xf32>
      %27 = vector.broadcast %26 : vector<1x128xf32> to vector<8x128xf32>
      %28 = vector.broadcast %cst_20 : f32 to vector<8x128xf32>
      %29 = arith.select %25, %27, %28 : vector<8x128xi1>, vector<8x128xf32>
      %c0_21 = arith.constant 0 : index
      %c0_22 = arith.constant 0 : index
      %30 = vector.load %arg6[%c0_21, %c0_22] : memref<8x128xf32, #tpu.memory_space<vmem>>, vector<8x128xf32>
      tpu.vector_store %arg6[%c0_21, %c0_22], %29 {strides = array<i32>} : memref<8x128xf32, #tpu.memory_space<vmem>>, vector<8x128xf32>,
      %c0_i32_23 = arith.constant 0 : i32
      %31 = vector.broadcast %c0_i32_23 : i32 to vector<8x128xi32>
      %32 = arith.cmpi eq, %23, %31 : vector<8x128xi32>
      %cst_24 = arith.constant 0.000000e+00 : f32
      %33 = vector.shape_cast %22 : vector<1x128xf32> to vector<1x128xf32>
      %34 = vector.broadcast %33 : vector<1x128xf32> to vector<8x128xf32>
      %35 = vector.broadcast %cst_24 : f32 to vector<8x128xf32>
      %36 = arith.select %32, %34, %35 : vector<8x128xi1>, vector<8x128xf32>
      %c0_25 = arith.constant 0 : index
      %c0_26 = arith.constant 0 : index
      %37 = vector.load %arg7[%c0_25, %c0_26] : memref<8x128xf32, #tpu.memory_space<vmem>>, vector<8x128xf32>
      tpu.vector_store %arg7[%c0_25, %c0_26], %36 {strides = array<i32>} : memref<8x128xf32, #tpu.memory_space<vmem>>, vector<8x128xf32>,
    } else {
    }
    return
  }
  func.func @transform_0(%arg0: i32, %arg1: i32) -> (i32, i32) {
    %c0_i32 = arith.constant 0 : i32
    return %arg0, %arg1 : i32, i32
  }
  func.func @transform_1(%arg0: i32, %arg1: i32) -> (i32, i32) {
    %c0_i32 = arith.constant 0 : i32
    %c0_i32_0 = arith.constant 0 : i32
    return %arg1, %c0_i32 : i32, i32
  }
  func.func @transform_2(%arg0: i32, %arg1: i32) -> (i32, i32) {
    %c0_i32 = arith.constant 0 : i32
    %c0_i32_0 = arith.constant 0 : i32
    %c0_i32_1 = arith.constant 0 : i32
    return %c0_i32, %c0_i32_0 : i32, i32
  }
  func.func @transform_3(%arg0: i32, %arg1: i32) -> (i32, i32) {
    %c0_i32 = arith.constant 0 : i32
    %c0_i32_0 = arith.constant 0 : i32
    return %arg0, %c0_i32 : i32, i32
  }
  func.func @transform_4(%arg0: i32, %arg1: i32) -> (i32, i32) {
    %c0_i32 = arith.constant 0 : i32
    %c0_i32_0 = arith.constant 0 : i32
    return %arg0, %c0_i32 : i32, i32
  }
  func.func @transform_5(%arg0: i32, %arg1: i32) -> (i32, i32) {
    %c0_i32 = arith.constant 0 : i32
    %c0_i32_0 = arith.constant 0 : i32
    return %arg0, %c0_i32 : i32, i32
  }
}

module attributes {stable_mosaic.version = 11 : i64} {
  func.func @_bn_kernel(%arg0: i32, %arg1: memref<1x128xf32, #tpu.memory_space<vmem>>, %arg2: memref<1x128xf32, #tpu.memory_space<vmem>>, %arg3: memref<128x128xbf16, #tpu.memory_space<vmem>>, %arg4: memref<128x128xf32, #tpu.memory_space<vmem>>) attributes {dimension_semantics = [#tpu.dimension_semantics<parallel>], iteration_bounds = array<i64: 1>, scalar_prefetch = 0 : i64, scratch_operands = 0 : i64, tpu.core_type = #tpu.core_type<tc>, window_params = [{pipeline_mode = #tpu.pipeline_mode<synchronous>, transform_indices = @transform_0, window_bounds = array<i64: 1, 128>}, {pipeline_mode = #tpu.pipeline_mode<synchronous>, transform_indices = @transform_1, window_bounds = array<i64: 1, 128>}, {transform_indices = @transform_2, window_bounds = array<i64: 128, 128>}, {transform_indices = @transform_3, window_bounds = array<i64: 128, 128>}]} {
    %c0 = arith.constant 0 : index
    %c0_0 = arith.constant 0 : index
    %0 = vector.load %arg3[%c0, %c0_0] : memref<128x128xbf16, #tpu.memory_space<vmem>>, vector<128x128xbf16>
    %1 = arith.extf %0 : vector<128x128xbf16> to vector<128x128xf32>
    %c0_1 = arith.constant 0 : index
    %c0_2 = arith.constant 0 : index
    %2 = vector.load %arg1[%c0_1, %c0_2] : memref<1x128xf32, #tpu.memory_space<vmem>>, vector<1x128xf32>
    %3 = vector.broadcast %2 : vector<1x128xf32> to vector<128x128xf32>
    %4 = arith.mulf %1, %3 : vector<128x128xf32>
    %c0_3 = arith.constant 0 : index
    %c0_4 = arith.constant 0 : index
    %5 = vector.load %arg2[%c0_3, %c0_4] : memref<1x128xf32, #tpu.memory_space<vmem>>, vector<1x128xf32>
    %6 = vector.broadcast %5 : vector<1x128xf32> to vector<128x128xf32>
    %7 = arith.addf %4, %6 : vector<128x128xf32>
    %c0_5 = arith.constant 0 : index
    %c0_6 = arith.constant 0 : index
    %8 = vector.load %arg4[%c0_5, %c0_6] : memref<128x128xf32, #tpu.memory_space<vmem>>, vector<128x128xf32>
    tpu.vector_store %arg4[%c0_5, %c0_6], %7 {strides = array<i32>} : memref<128x128xf32, #tpu.memory_space<vmem>>, vector<128x128xf32>,
    return
  }
  func.func @transform_0(%arg0: i32) -> (i32, i32) {
    %c0_i32 = arith.constant 0 : i32
    %c0_i32_0 = arith.constant 0 : i32
    %c0_i32_1 = arith.constant 0 : i32
    return %c0_i32, %c0_i32_0 : i32, i32
  }
  func.func @transform_1(%arg0: i32) -> (i32, i32) {
    %c0_i32 = arith.constant 0 : i32
    %c0_i32_0 = arith.constant 0 : i32
    %c0_i32_1 = arith.constant 0 : i32
    return %c0_i32, %c0_i32_0 : i32, i32
  }
  func.func @transform_2(%arg0: i32) -> (i32, i32) {
    %c0_i32 = arith.constant 0 : i32
    %c0_i32_0 = arith.constant 0 : i32
    return %arg0, %c0_i32 : i32, i32
  }
  func.func @transform_3(%arg0: i32) -> (i32, i32) {
    %c0_i32 = arith.constant 0 : i32
    %c0_i32_0 = arith.constant 0 : i32
    return %arg0, %c0_i32 : i32, i32
  }
}

</mosaic_0001>

<llo_original>
// kernel: gcn_layer.3
$region0: #{gcn_layer.3}
  #allocation0 [shape = 'u32[]', space=smem, size = 0x4, offset = 0x4, fixed_abs, tag = 'smem constant byte address 0x4 - core index']
  #allocation1 [shape = 'u32[144,128]{1,0:T(1,128)}', space=vmem, size = 0x12000, scoped, tag = 'internal scratch']
  %s0 = inlined_call_operand.vmem [shape: f32[1,128], index: 0, kind: input, shape index: {}]
  %s1 = inlined_call_operand.vmem [shape: f32[1,128], index: 1, kind: input, shape index: {}]
  %s2 = inlined_call_operand.vmem [shape: bf16[128,128], index: 2, kind: input, shape index: {}]
  %s3 = inlined_call_operand.vmem [shape: f32[128,128], index: 3, kind: output, shape index: {}]
  %s4 = sld [smem:[#allocation0]]
  $region22: #{gcn_layer.3} parent=0
    _
  %s6 = ssub.s32 1, %s4
  %s7 = scalar_select 0, %s6, %s4
  // Predicated region
  $region2: #{gcn_layer.3} parent=0 // pred_check
    _
  $region3: #{gcn_layer.3} parent=0 // pred_check_branch
    %9 = sbr.rel (0) target = $region5
  $region4: #{gcn_layer.3} parent=0 // pred_region
    _
  $region5: #{gcn_layer.3} parent=0 // pred_fallthru
    _
  // Predicated region
  $region6: #{gcn_layer.3} parent=0 // pred_check
    _
  $region7: #{gcn_layer.3} parent=0 // pred_check_branch
    %11 = sbr.rel (0) target = $region9
  $region8: #{gcn_layer.3} parent=0 // pred_region
    _
  $region9: #{gcn_layer.3} parent=0 // pred_fallthru
    _
  // Predicated region
  $region10: #{gcn_layer.3} parent=0 // pred_check
    _
  $region11: #{gcn_layer.3} parent=0 // pred_check_branch
    %13 = sbr.rel (0) target = $region13
  $region12: #{gcn_layer.3} parent=0 // pred_region
    _
  $region13: #{gcn_layer.3} parent=0 // pred_fallthru
    _
  %v14 = vld [vmem:[%s2] sm:$0xf]
  %v15 = vld [vmem:[%s2 + $0x4] sm:$0xf]
  %v16 = vld [vmem:[%s2 + $0x8] sm:$0xf]
  %v17 = vld [vmem:[%s2 + $0xc] sm:$0xf]
  %v18 = vld [vmem:[%s2 + $0x10] sm:$0xf]
  %v19 = vld [vmem:[%s2 + $0x14] sm:$0xf]
  %v20 = vld [vmem:[%s2 + $0x18] sm:$0xf]
  %v21 = vld [vmem:[%s2 + $0x1c] sm:$0xf]
  %v22 = vld [vmem:[%s2 + $0x20] sm:$0xf]
  %v23 = vld [vmem:[%s2 + $0x24] sm:$0xf]
  %v24 = vld [vmem:[%s2 + $0x28] sm:$0xf]
  %v25 = vld [vmem:[%s2 + $0x2c] sm:$0xf]
  %v26 = vld [vmem:[%s2 + $0x30] sm:$0xf]
  %v27 = vld [vmem:[%s2 + $0x34] sm:$0xf]
  %v28 = vld [vmem:[%s2 + $0x38] sm:$0xf]
  %v29 = vld [vmem:[%s2 + $0x3c] sm:$0xf]
  %v30 = vunpack.c.l.bf16 %v14
  %v31 = vunpack.c.l.bf16 %v15
  %v32 = vunpack.c.l.bf16 %v16
  %v33 = vunpack.c.l.bf16 %v17
  %v34 = vunpack.c.l.bf16 %v18
  %v35 = vunpack.c.l.bf16 %v19
  %v36 = vunpack.c.l.bf16 %v20
  %v37 = vunpack.c.l.bf16 %v21
  %v38 = vunpack.c.l.bf16 %v22
  %v39 = vunpack.c.l.bf16 %v23
  %v40 = vunpack.c.l.bf16 %v24
  %v41 = vunpack.c.l.bf16 %v25
  %v42 = vunpack.c.l.bf16 %v26
  %v43 = vunpack.c.l.bf16 %v27
  %v44 = vunpack.c.l.bf16 %v28
  %v45 = vunpack.c.l.bf16 %v29
  %v46 = vld [vmem:[%s0] sm:$0x1]
  %v48 = vlaneseq
  %v49 = vshrl.u32 %v48, 7
  %v50 = vsub.s32 0, %v49
  %v51 = vrot.slane %v46, %v50
  %v53 = vmul.f32 %v30, %v51
  %v54 = vmul.f32 %v31, %v51
  %v55 = vmul.f32 %v32, %v51
  %v56 = vmul.f32 %v33, %v51
  %v57 = vmul.f32 %v34, %v51
  %v58 = vmul.f32 %v35, %v51
  %v59 = vmul.f32 %v36, %v51
  %v60 = vmul.f32 %v37, %v51
  %v61 = vmul.f32 %v38, %v51
  %v62 = vmul.f32 %v39, %v51
  %v63 = vmul.f32 %v40, %v51
  %v64 = vmul.f32 %v41, %v51
  %v65 = vmul.f32 %v42, %v51
  %v66 = vmul.f32 %v43, %v51
  %v67 = vmul.f32 %v44, %v51
  %v68 = vmul.f32 %v45, %v51
  %v69 = vld [vmem:[%s1] sm:$0x1]
  %v71 = vlaneseq
  %v72 = vshrl.u32 %v71, 7
  %v73 = vsub.s32 0, %v72
  %v74 = vrot.slane %v69, %v73
  %v76 = vadd.f32 %v53, %v74
  %v77 = vadd.f32 %v54, %v74
  %v78 = vadd.f32 %v55, %v74
  %v79 = vadd.f32 %v56, %v74
  %v80 = vadd.f32 %v57, %v74
  %v81 = vadd.f32 %v58, %v74
  %v82 = vadd.f32 %v59, %v74
  %v83 = vadd.f32 %v60, %v74
  %v84 = vadd.f32 %v61, %v74
  %v85 = vadd.f32 %v62, %v74
  %v86 = vadd.f32 %v63, %v74
  %v87 = vadd.f32 %v64, %v74
  %v88 = vadd.f32 %v65, %v74
  %v89 = vadd.f32 %v66, %v74
  %v90 = vadd.f32 %v67, %v74
  %v91 = vadd.f32 %v68, %v74
  %92 = vst [vmem:[%s3] sm:$0xff] %v76
  %93 = vst [vmem:[%s3 + $0x8] sm:$0xff] %v77
  %94 = vst [vmem:[%s3 + $0x10] sm:$0xff] %v78
  %95 = vst [vmem:[%s3 + $0x18] sm:$0xff] %v79
  %96 = vst [vmem:[%s3 + $0x20] sm:$0xff] %v80
  %97 = vst [vmem:[%s3 + $0x28] sm:$0xff] %v81
  %98 = vst [vmem:[%s3 + $0x30] sm:$0xff] %v82
  %99 = vst [vmem:[%s3 + $0x38] sm:$0xff] %v83
  %100 = vst [vmem:[%s3 + $0x40] sm:$0xff] %v84
  %101 = vst [vmem:[%s3 + $0x48] sm:$0xff] %v85
  %102 = vst [vmem:[%s3 + $0x50] sm:$0xff] %v86
  %103 = vst [vmem:[%s3 + $0x58] sm:$0xff] %v87
  %104 = vst [vmem:[%s3 + $0x60] sm:$0xff] %v88
  %105 = vst [vmem:[%s3 + $0x68] sm:$0xff] %v89
  %106 = vst [vmem:[%s3 + $0x70] sm:$0xff] %v90
  %107 = vst [vmem:[%s3 + $0x78] sm:$0xff] %v91
  // Predicated region
  $region14: #{gcn_layer.3} parent=0 // pred_check
    _
  $region15: #{gcn_layer.3} parent=0 // pred_check_branch
    %109 = sbr.rel (0) target = $region17
  $region16: #{gcn_layer.3} parent=0 // pred_region
    _
  $region17: #{gcn_layer.3} parent=0 // pred_fallthru
    _
  // Predicated region
  $region18: #{gcn_layer.3} parent=0 // pred_check
    _
  $region19: #{gcn_layer.3} parent=0 // pred_check_branch
    %111 = sbr.rel (0) target = $region21
  $region20: #{gcn_layer.3} parent=0 // pred_region
    _
  $region21: #{gcn_layer.3} parent=0 // pred_fallthru
    _

// kernel: gcn_layer.2
$region0: #{gcn_layer.2}
  #allocation0 [shape = 'u32[]', space=smem, size = 0x4, offset = 0x4, fixed_abs, tag = 'smem constant byte address 0x4 - core index']
  #allocation1 [shape = 'u32[144,128]{1,0:T(1,128)}', space=vmem, size = 0x12000, scoped, tag = 'internal scratch']
  #allocation2 [shape = 'f32[128,128]{1,0:T(8,128)}', space=vmem, size = 0x10000, scoped, tag = 'scratch operand']
  %s0 = inlined_call_operand.vmem [shape: bf16[128,128], index: 0, kind: input, shape index: {}]
  %s1 = inlined_call_operand.vmem [shape: bf16[128,128], index: 1, kind: input, shape index: {}]
  %s2 = inlined_call_operand.vmem [shape: bf16[128,128], index: 2, kind: input, shape index: {}]
  %s3 = inlined_call_operand.vmem [shape: bf16[128,128], index: 3, kind: output, shape index: {0}]
  %s4 = inlined_call_operand.vmem [shape: f32[8,128], index: 4, kind: output, shape index: {1}]
  %s5 = inlined_call_operand.vmem [shape: f32[8,128], index: 5, kind: output, shape index: {2}]
  %6 = xla_tuple %s3, %s4, %s5
  %s7 = sld [smem:[#allocation0]]
  $region46: #{gcn_layer.2} parent=0
    _
  %s9 = ssub.s32 1, %s7
  %s10 = scalar_select 0, %s9, %s7
  // Predicated region
  $region2: #{gcn_layer.2} parent=0 // pred_check
    _
  $region3: #{gcn_layer.2} parent=0 // pred_check_branch
    %12 = sbr.rel (0) target = $region5
  $region4: #{gcn_layer.2} parent=0 // pred_region
    _
  $region5: #{gcn_layer.2} parent=0 // pred_fallthru
    _
  // Predicated region
  $region6: #{gcn_layer.2} parent=0 // pred_check
    _
  $region7: #{gcn_layer.2} parent=0 // pred_check_branch
    %14 = sbr.rel (0) target = $region9
  $region8: #{gcn_layer.2} parent=0 // pred_region
    _
  $region9: #{gcn_layer.2} parent=0 // pred_fallthru
    _
  // Predicated region
  $region10: #{gcn_layer.2} parent=0 // pred_check
    _
  $region11: #{gcn_layer.2} parent=0 // pred_check_branch
    %16 = sbr.rel (0) target = $region13
  $region12: #{gcn_layer.2} parent=0 // pred_region
    _
  $region13: #{gcn_layer.2} parent=0 // pred_fallthru
    _
  %p18 = scmp.eq.s32.totalorder 0, 0
  // Predicated region
  $region14: #{gcn_layer.2} parent=0 // pred_check
    %p19 = pneg %p18
  $region15: #{gcn_layer.2} parent=0 // pred_check_branch
    %21 = sbr.rel (%p19) target = $region17
  $region16: #{gcn_layer.2} parent=0 // pred_region
    %22 = vst [vmem:[#allocation2] sm:$0xff] 0.0
    %23 = vst [vmem:[#allocation2 + $0x8] sm:$0xff] 0.0
    %24 = vst [vmem:[#allocation2 + $0x10] sm:$0xff] 0.0
    %25 = vst [vmem:[#allocation2 + $0x18] sm:$0xff] 0.0
    %26 = vst [vmem:[#allocation2 + $0x20] sm:$0xff] 0.0
    %27 = vst [vmem:[#allocation2 + $0x28] sm:$0xff] 0.0
    %28 = vst [vmem:[#allocation2 + $0x30] sm:$0xff] 0.0
    %29 = vst [vmem:[#allocation2 + $0x38] sm:$0xff] 0.0
    %30 = vst [vmem:[#allocation2 + $0x40] sm:$0xff] 0.0
    %31 = vst [vmem:[#allocation2 + $0x48] sm:$0xff] 0.0
    %32 = vst [vmem:[#allocation2 + $0x50] sm:$0xff] 0.0
    %33 = vst [vmem:[#allocation2 + $0x58] sm:$0xff] 0.0
    %34 = vst [vmem:[#allocation2 + $0x60] sm:$0xff] 0.0
    %35 = vst [vmem:[#allocation2 + $0x68] sm:$0xff] 0.0
    %36 = vst [vmem:[#allocation2 + $0x70] sm:$0xff] 0.0
    %37 = vst [vmem:[#allocation2 + $0x78] sm:$0xff] 0.0
  $region17: #{gcn_layer.2} parent=0 // pred_fallthru
    _
  %v38 = vld [vmem:[#allocation2] sm:$0xff]
  %v39 = vld [vmem:[#allocation2 + $0x8] sm:$0xff]
  %v40 = vld [vmem:[#allocation2 + $0x10] sm:$0xff]
  %v41 = vld [vmem:[#allocation2 + $0x18] sm:$0xff]
  %v42 = vld [vmem:[#allocation2 + $0x20] sm:$0xff]
  %v43 = vld [vmem:[#allocation2 + $0x28] sm:$0xff]
  %v44 = vld [vmem:[#allocation2 + $0x30] sm:$0xff]
  %v45 = vld [vmem:[#allocation2 + $0x38] sm:$0xff]
  %v46 = vld [vmem:[#allocation2 + $0x40] sm:$0xff]
  %v47 = vld [vmem:[#allocation2 + $0x48] sm:$0xff]
  %v48 = vld [vmem:[#allocation2 + $0x50] sm:$0xff]
  %v49 = vld [vmem:[#allocation2 + $0x58] sm:$0xff]
  %v50 = vld [vmem:[#allocation2 + $0x60] sm:$0xff]
  %v51 = vld [vmem:[#allocation2 + $0x68] sm:$0xff]
  %v52 = vld [vmem:[#allocation2 + $0x70] sm:$0xff]
  %v53 = vld [vmem:[#allocation2 + $0x78] sm:$0xff]
  %v54 = vld [vmem:[%s0] sm:$0xf]
  %v55 = vld [vmem:[%s0 + $0x4] sm:$0xf]
  %v56 = vld [vmem:[%s0 + $0x8] sm:$0xf]
  %v57 = vld [vmem:[%s0 + $0xc] sm:$0xf]
  %v58 = vld [vmem:[%s0 + $0x10] sm:$0xf]
  %v59 = vld [vmem:[%s0 + $0x14] sm:$0xf]
  %v60 = vld [vmem:[%s0 + $0x18] sm:$0xf]
  %v61 = vld [vmem:[%s0 + $0x1c] sm:$0xf]
  %v62 = vld [vmem:[%s0 + $0x20] sm:$0xf]
  %v63 = vld [vmem:[%s0 + $0x24] sm:$0xf]
  %v64 = vld [vmem:[%s0 + $0x28] sm:$0xf]
  %v65 = vld [vmem:[%s0 + $0x2c] sm:$0xf]
  %v66 = vld [vmem:[%s0 + $0x30] sm:$0xf]
  %v67 = vld [vmem:[%s0 + $0x34] sm:$0xf]
  %v68 = vld [vmem:[%s0 + $0x38] sm:$0xf]
  %v69 = vld [vmem:[%s0 + $0x3c] sm:$0xf]
  %v70 = vld [vmem:[%s1] sm:$0xf]
  %v71 = vld [vmem:[%s1 + $0x4] sm:$0xf]
  %v72 = vld [vmem:[%s1 + $0x8] sm:$0xf]
  %v73 = vld [vmem:[%s1 + $0xc] sm:$0xf]
  %v74 = vld [vmem:[%s1 + $0x10] sm:$0xf]
  %v75 = vld [vmem:[%s1 + $0x14] sm:$0xf]
  %v76 = vld [vmem:[%s1 + $0x18] sm:$0xf]
  %v77 = vld [vmem:[%s1 + $0x1c] sm:$0xf]
  %v78 = vld [vmem:[%s1 + $0x20] sm:$0xf]
  %v79 = vld [vmem:[%s1 + $0x24] sm:$0xf]
  %v80 = vld [vmem:[%s1 + $0x28] sm:$0xf]
  %v81 = vld [vmem:[%s1 + $0x2c] sm:$0xf]
  %v82 = vld [vmem:[%s1 + $0x30] sm:$0xf]
  %v83 = vld [vmem:[%s1 + $0x34] sm:$0xf]
  %v84 = vld [vmem:[%s1 + $0x38] sm:$0xf]
  %v85 = vld [vmem:[%s1 + $0x3c] sm:$0xf]
  %v102 = vunpack.c.l.b16 %v54
  %v103 = vunpack.c.l.b16 %v55
  %v104 = vunpack.c.l.b16 %v56
  %v105 = vunpack.c.l.b16 %v57
  %v106 = vunpack.c.l.b16 %v58
  %v107 = vunpack.c.l.b16 %v59
  %v108 = vunpack.c.l.b16 %v60
  %v109 = vunpack.c.l.b16 %v61
  %v110 = vunpack.c.l.b16 %v62
  %v111 = vunpack.c.l.b16 %v63
  %v112 = vunpack.c.l.b16 %v64
  %v113 = vunpack.c.l.b16 %v65
  %v114 = vunpack.c.l.b16 %v66
  %v115 = vunpack.c.l.b16 %v67
  %v116 = vunpack.c.l.b16 %v68
  %v117 = vunpack.c.l.b16 %v69
  %v118 = vpack.c.b16 %v103, %v102
  %v119 = vpack.c.b16 %v105, %v104
  %v120 = vpack.c.b16 %v107, %v106
  %v121 = vpack.c.b16 %v109, %v108
  %v122 = vpack.c.b16 %v111, %v110
  %v123 = vpack.c.b16 %v113, %v112
  %v124 = vpack.c.b16 %v115, %v114
  %v125 = vpack.c.b16 %v117, %v116
  %v150 = vunpack.c.l.b16 %v70
  %v151 = vunpack.c.l.b16 %v71
  %v152 = vunpack.c.l.b16 %v72
  %v153 = vunpack.c.l.b16 %v73
  %v154 = vunpack.c.l.b16 %v74
  %v155 = vunpack.c.l.b16 %v75
  %v156 = vunpack.c.l.b16 %v76
  %v157 = vunpack.c.l.b16 %v77
  %v158 = vunpack.c.l.b16 %v78
  %v159 = vunpack.c.l.b16 %v79
  %v160 = vunpack.c.l.b16 %v80
  %v161 = vunpack.c.l.b16 %v81
  %v162 = vunpack.c.l.b16 %v82
  %v163 = vunpack.c.l.b16 %v83
  %v164 = vunpack.c.l.b16 %v84
  %v165 = vunpack.c.l.b16 %v85
  %v166 = vpack.c.b16 %v151, %v150
  %v167 = vpack.c.b16 %v153, %v152
  %v168 = vpack.c.b16 %v155, %v154
  %v169 = vpack.c.b16 %v157, %v156
  %v170 = vpack.c.b16 %v159, %v158
  %v171 = vpack.c.b16 %v161, %v160
  %v172 = vpack.c.b16 %v163, %v162
  %v173 = vpack.c.b16 %v165, %v164
  %182 = vmatprep.subr.bf16.mxu0 0
  %183 = vmatpush1.bf16.msra.mxu0 %v173
  %184 = vmatprep.subr.bf16.mxu0 0
  %185 = vmatpush1.bf16.msra.mxu0 %v172
  %186 = vmatprep.subr.bf16.mxu0 0
  %187 = vmatpush1.bf16.msra.mxu0 %v171
  %188 = vmatprep.subr.bf16.mxu0 0
  %189 = vmatpush1.bf16.msra.mxu0 %v170
  %190 = vmatprep.subr.bf16.mxu0 0
  %191 = vmatpush1.bf16.msra.mxu0 %v169
  %192 = vmatprep.subr.bf16.mxu0 0
  %193 = vmatpush1.bf16.msra.mxu0 %v168
  %194 = vmatprep.subr.bf16.mxu0 0
  %195 = vmatpush1.bf16.msra.mxu0 %v167
  %196 = vmatprep.subr.bf16.mxu0 0
  %197 = vmatpush1.bf16.msra.mxu0 %v166
  %198 = vmatprep.subr.bf16.mxu0 0
  %199 = vmatpush2.bf16.msra.mxu0 0
  %200 = vmatprep.subr.bf16.mxu0 0
  %201 = vmatpush2.bf16.msra.mxu0 0
  %202 = vmatprep.subr.bf16.mxu0 0
  %203 = vmatpush2.bf16.msra.mxu0 0
  %204 = vmatprep.subr.bf16.mxu0 0
  %205 = vmatpush2.bf16.msra.mxu0 0
  %206 = vmatprep.subr.bf16.mxu0 0
  %207 = vmatpush2.bf16.msra.mxu0 0
  %208 = vmatprep.subr.bf16.mxu0 0
  %209 = vmatpush2.bf16.msra.mxu0 0
  %210 = vmatprep.subr.bf16.mxu0 0
  %211 = vmatpush2.bf16.msra.mxu0 0
  %212 = vmatprep.subr.bf16.mxu0 0
  %213 = vmatpush2.bf16.msra.mxu0 0
  %214 = vmatprep.mubr.bf16.mxu0 0
  %215 = vmatmul.mubr.bf16.gmra.mxu0 %v118
  %v216 = vpop.f32.mrf.mxu0
  %v217 = vadd.f32 0.0, %v216
  %v218 = vpop.f32.mrf.mxu0
  %v219 = vpop.f32.mrf.mxu0
  %v220 = vadd.f32 0.0, %v219
  %v221 = vpop.f32.mrf.mxu0
  %222 = vmatprep.mubr.bf16.mxu0 0
  %223 = vmatmul.mubr.bf16.gmra.mxu0 %v119
  %v224 = vpop.f32.mrf.mxu0
  %v225 = vadd.f32 0.0, %v224
  %v226 = vpop.f32.mrf.mxu0
  %v227 = vpop.f32.mrf.mxu0
  %v228 = vadd.f32 0.0, %v227
  %v229 = vpop.f32.mrf.mxu0
  %230 = vmatprep.mubr.bf16.mxu0 0
  %231 = vmatmul.mubr.bf16.gmra.mxu0 %v120
  %v232 = vpop.f32.mrf.mxu0
  %v233 = vadd.f32 0.0, %v232
  %v234 = vpop.f32.mrf.mxu0
  %v235 = vpop.f32.mrf.mxu0
  %v236 = vadd.f32 0.0, %v235
  %v237 = vpop.f32.mrf.mxu0
  %238 = vmatprep.mubr.bf16.mxu0 0
  %239 = vmatmul.mubr.bf16.gmra.mxu0 %v121
  %v240 = vpop.f32.mrf.mxu0
  %v241 = vadd.f32 0.0, %v240
  %v242 = vpop.f32.mrf.mxu0
  %v243 = vpop.f32.mrf.mxu0
  %v244 = vadd.f32 0.0, %v243
  %v245 = vpop.f32.mrf.mxu0
  %246 = vmatprep.mubr.bf16.mxu0 0
  %247 = vmatmul.mubr.bf16.gmra.mxu0 %v122
  %v248 = vpop.f32.mrf.mxu0
  %v249 = vadd.f32 0.0, %v248
  %v250 = vpop.f32.mrf.mxu0
  %v251 = vpop.f32.mrf.mxu0
  %v252 = vadd.f32 0.0, %v251
  %v253 = vpop.f32.mrf.mxu0
  %254 = vmatprep.mubr.bf16.mxu0 0
  %255 = vmatmul.mubr.bf16.gmra.mxu0 %v123
  %v256 = vpop.f32.mrf.mxu0
  %v257 = vadd.f32 0.0, %v256
  %v258 = vpop.f32.mrf.mxu0
  %v259 = vpop.f32.mrf.mxu0
  %v260 = vadd.f32 0.0, %v259
  %v261 = vpop.f32.mrf.mxu0
  %262 = vmatprep.mubr.bf16.mxu0 0
  %263 = vmatmul.mubr.bf16.gmra.mxu0 %v124
  %v264 = vpop.f32.mrf.mxu0
  %v265 = vadd.f32 0.0, %v264
  %v266 = vpop.f32.mrf.mxu0
  %v267 = vpop.f32.mrf.mxu0
  %v268 = vadd.f32 0.0, %v267
  %v269 = vpop.f32.mrf.mxu0
  %270 = vmatprep.mubr.bf16.mxu0 0
  %271 = vmatmul.mubr.bf16.gmra.mxu0 %v125
  %v272 = vpop.f32.mrf.mxu0
  %v273 = vadd.f32 0.0, %v272
  %v274 = vpop.f32.mrf.mxu0
  %v275 = vpop.f32.mrf.mxu0
  %v276 = vadd.f32 0.0, %v275
  %v277 = vpop.f32.mrf.mxu0
  %278 = vdwg.mxu0
  %v279 = vadd.f32 %v38, %v217
  %v280 = vadd.f32 %v39, %v220
  %v281 = vadd.f32 %v40, %v225
  %v282 = vadd.f32 %v41, %v228
  %v283 = vadd.f32 %v42, %v233
  %v284 = vadd.f32 %v43, %v236
  %v285 = vadd.f32 %v44, %v241
  %v286 = vadd.f32 %v45, %v244
  %v287 = vadd.f32 %v46, %v249
  %v288 = vadd.f32 %v47, %v252
  %v289 = vadd.f32 %v48, %v257
  %v290 = vadd.f32 %v49, %v260
  %v291 = vadd.f32 %v50, %v265
  %v292 = vadd.f32 %v51, %v268
  %v293 = vadd.f32 %v52, %v273
  %v294 = vadd.f32 %v53, %v276
  %295 = vst [vmem:[#allocation2] sm:$0xff] %v279
  %296 = vst [vmem:[#allocation2 + $0x8] sm:$0xff] %v280
  %297 = vst [vmem:[#allocation2 + $0x10] sm:$0xff] %v281
  %298 = vst [vmem:[#allocation2 + $0x18] sm:$0xff] %v282
  %299 = vst [vmem:[#allocation2 + $0x20] sm:$0xff] %v283
  %300 = vst [vmem:[#allocation2 + $0x28] sm:$0xff] %v284
  %301 = vst [vmem:[#allocation2 + $0x30] sm:$0xff] %v285
  %302 = vst [vmem:[#allocation2 + $0x38] sm:$0xff] %v286
  %303 = vst [vmem:[#allocation2 + $0x40] sm:$0xff] %v287
  %304 = vst [vmem:[#allocation2 + $0x48] sm:$0xff] %v288
  %305 = vst [vmem:[#allocation2 + $0x50] sm:$0xff] %v289
  %306 = vst [vmem:[#allocation2 + $0x58] sm:$0xff] %v290
  %307 = vst [vmem:[#allocation2 + $0x60] sm:$0xff] %v291
  %308 = vst [vmem:[#allocation2 + $0x68] sm:$0xff] %v292
  %309 = vst [vmem:[#allocation2 + $0x70] sm:$0xff] %v293
  %310 = vst [vmem:[#allocation2 + $0x78] sm:$0xff] %v294
  // Predicated region
  $region18: #{gcn_layer.2} parent=0 // pred_check
    %p311 = pneg %p18
  $region19: #{gcn_layer.2} parent=0 // pred_check_branch
    %313 = sbr.rel (%p311) target = $region21
  $region20: #{gcn_layer.2} parent=0 // pred_region
    %v314 = vld [vmem:[#allocation2] sm:$0xff]
    %v315 = vld [vmem:[#allocation2 + $0x8] sm:$0xff]
    %v316 = vld [vmem:[#allocation2 + $0x10] sm:$0xff]
    %v317 = vld [vmem:[#allocation2 + $0x18] sm:$0xff]
    %v318 = vld [vmem:[#allocation2 + $0x20] sm:$0xff]
    %v319 = vld [vmem:[#allocation2 + $0x28] sm:$0xff]
    %v320 = vld [vmem:[#allocation2 + $0x30] sm:$0xff]
    %v321 = vld [vmem:[#allocation2 + $0x38] sm:$0xff]
    %v322 = vld [vmem:[#allocation2 + $0x40] sm:$0xff]
    %v323 = vld [vmem:[#allocation2 + $0x48] sm:$0xff]
    %v324 = vld [vmem:[#allocation2 + $0x50] sm:$0xff]
    %v325 = vld [vmem:[#allocation2 + $0x58] sm:$0xff]
    %v326 = vld [vmem:[#allocation2 + $0x60] sm:$0xff]
    %v327 = vld [vmem:[#allocation2 + $0x68] sm:$0xff]
    %v328 = vld [vmem:[#allocation2 + $0x70] sm:$0xff]
    %v329 = vld [vmem:[#allocation2 + $0x78] sm:$0xff]
    %v330 = vpack.c.bf16 %v315, %v314
    %v331 = vpack.c.bf16 %v317, %v316
    %v332 = vpack.c.bf16 %v319, %v318
    %v333 = vpack.c.bf16 %v321, %v320
    %v334 = vpack.c.bf16 %v323, %v322
    %v335 = vpack.c.bf16 %v325, %v324
    %v336 = vpack.c.bf16 %v327, %v326
    %v337 = vpack.c.bf16 %v329, %v328
    %v338 = vld [vmem:[%s2] sm:$0xf]
    %v339 = vld [vmem:[%s2 + $0x4] sm:$0xf]
    %v340 = vld [vmem:[%s2 + $0x8] sm:$0xf]
    %v341 = vld [vmem:[%s2 + $0xc] sm:$0xf]
    %v342 = vld [vmem:[%s2 + $0x10] sm:$0xf]
    %v343 = vld [vmem:[%s2 + $0x14] sm:$0xf]
    %v344 = vld [vmem:[%s2 + $0x18] sm:$0xf]
    %v345 = vld [vmem:[%s2 + $0x1c] sm:$0xf]
    %v346 = vld [vmem:[%s2 + $0x20] sm:$0xf]
    %v347 = vld [vmem:[%s2 + $0x24] sm:$0xf]
    %v348 = vld [vmem:[%s2 + $0x28] sm:$0xf]
    %v349 = vld [vmem:[%s2 + $0x2c] sm:$0xf]
    %v350 = vld [vmem:[%s2 + $0x30] sm:$0xf]
    %v351 = vld [vmem:[%s2 + $0x34] sm:$0xf]
    %v352 = vld [vmem:[%s2 + $0x38] sm:$0xf]
    %v353 = vld [vmem:[%s2 + $0x3c] sm:$0xf]
    %v370 = vunpack.c.l.b16 %v338
    %v371 = vunpack.c.l.b16 %v339
    %v372 = vunpack.c.l.b16 %v340
    %v373 = vunpack.c.l.b16 %v341
    %v374 = vunpack.c.l.b16 %v342
    %v375 = vunpack.c.l.b16 %v343
    %v376 = vunpack.c.l.b16 %v344
    %v377 = vunpack.c.l.b16 %v345
    %v378 = vunpack.c.l.b16 %v346
    %v379 = vunpack.c.l.b16 %v347
    %v380 = vunpack.c.l.b16 %v348
    %v381 = vunpack.c.l.b16 %v349
    %v382 = vunpack.c.l.b16 %v350
    %v383 = vunpack.c.l.b16 %v351
    %v384 = vunpack.c.l.b16 %v352
    %v385 = vunpack.c.l.b16 %v353
    %v386 = vpack.c.b16 %v371, %v370
    %v387 = vpack.c.b16 %v373, %v372
    %v388 = vpack.c.b16 %v375, %v374
    %v389 = vpack.c.b16 %v377, %v376
    %v390 = vpack.c.b16 %v379, %v378
    %v391 = vpack.c.b16 %v381, %v380
    %v392 = vpack.c.b16 %v383, %v382
    %v393 = vpack.c.b16 %v385, %v384
    %402 = vmatprep.subr.bf16.mxu0 0
    %403 = vmatpush1.bf16.msra.mxu0 %v393
    %404 = vmatprep.subr.bf16.mxu0 0
    %405 = vmatpush1.bf16.msra.mxu0 %v392
    %406 = vmatprep.subr.bf16.mxu0 0
    %407 = vmatpush1.bf16.msra.mxu0 %v391
    %408 = vmatprep.subr.bf16.mxu0 0
    %409 = vmatpush1.bf16.msra.mxu0 %v390
    %410 = vmatprep.subr.bf16.mxu0 0
    %411 = vmatpush1.bf16.msra.mxu0 %v389
    %412 = vmatprep.subr.bf16.mxu0 0
    %413 = vmatpush1.bf16.msra.mxu0 %v388
    %414 = vmatprep.subr.bf16.mxu0 0
    %415 = vmatpush1.bf16.msra.mxu0 %v387
    %416 = vmatprep.subr.bf16.mxu0 0
    %417 = vmatpush1.bf16.msra.mxu0 %v386
    %418 = vmatprep.subr.bf16.mxu0 0
    %419 = vmatpush2.bf16.msra.mxu0 0
    %420 = vmatprep.subr.bf16.mxu0 0
    %421 = vmatpush2.bf16.msra.mxu0 0
    %422 = vmatprep.subr.bf16.mxu0 0
    %423 = vmatpush2.bf16.msra.mxu0 0
    %424 = vmatprep.subr.bf16.mxu0 0
    %425 = vmatpush2.bf16.msra.mxu0 0
    %426 = vmatprep.subr.bf16.mxu0 0
    %427 = vmatpush2.bf16.msra.mxu0 0
    %428 = vmatprep.subr.bf16.mxu0 0
    %429 = vmatpush2.bf16.msra.mxu0 0
    %430 = vmatprep.subr.bf16.mxu0 0
    %431 = vmatpush2.bf16.msra.mxu0 0
    %432 = vmatprep.subr.bf16.mxu0 0
    %433 = vmatpush2.bf16.msra.mxu0 0
    %434 = vmatprep.mubr.bf16.mxu0 0
    %435 = vmatmul.mubr.bf16.gmra.mxu0 %v330
    %v436 = vpop.f32.mrf.mxu0
    %v437 = vadd.f32 0.0, %v436
    %v438 = vpop.f32.mrf.mxu0
    %v439 = vpop.f32.mrf.mxu0
    %v440 = vadd.f32 0.0, %v439
    %v441 = vpop.f32.mrf.mxu0
    %442 = vmatprep.mubr.bf16.mxu0 0
    %443 = vmatmul.mubr.bf16.gmra.mxu0 %v331
    %v444 = vpop.f32.mrf.mxu0
    %v445 = vadd.f32 0.0, %v444
    %v446 = vpop.f32.mrf.mxu0
    %v447 = vpop.f32.mrf.mxu0
    %v448 = vadd.f32 0.0, %v447
    %v449 = vpop.f32.mrf.mxu0
    %450 = vmatprep.mubr.bf16.mxu0 0
    %451 = vmatmul.mubr.bf16.gmra.mxu0 %v332
    %v452 = vpop.f32.mrf.mxu0
    %v453 = vadd.f32 0.0, %v452
    %v454 = vpop.f32.mrf.mxu0
    %v455 = vpop.f32.mrf.mxu0
    %v456 = vadd.f32 0.0, %v455
    %v457 = vpop.f32.mrf.mxu0
    %458 = vmatprep.mubr.bf16.mxu0 0
    %459 = vmatmul.mubr.bf16.gmra.mxu0 %v333
    %v460 = vpop.f32.mrf.mxu0
    %v461 = vadd.f32 0.0, %v460
    %v462 = vpop.f32.mrf.mxu0
    %v463 = vpop.f32.mrf.mxu0
    %v464 = vadd.f32 0.0, %v463
    %v465 = vpop.f32.mrf.mxu0
    %466 = vmatprep.mubr.bf16.mxu0 0
    %467 = vmatmul.mubr.bf16.gmra.mxu0 %v334
    %v468 = vpop.f32.mrf.mxu0
    %v469 = vadd.f32 0.0, %v468
    %v470 = vpop.f32.mrf.mxu0
    %v471 = vpop.f32.mrf.mxu0
    %v472 = vadd.f32 0.0, %v471
    %v473 = vpop.f32.mrf.mxu0
    %474 = vmatprep.mubr.bf16.mxu0 0
    %475 = vmatmul.mubr.bf16.gmra.mxu0 %v335
    %v476 = vpop.f32.mrf.mxu0
    %v477 = vadd.f32 0.0, %v476
    %v478 = vpop.f32.mrf.mxu0
    %v479 = vpop.f32.mrf.mxu0
    %v480 = vadd.f32 0.0, %v479
    %v481 = vpop.f32.mrf.mxu0
    %482 = vmatprep.mubr.bf16.mxu0 0
    %483 = vmatmul.mubr.bf16.gmra.mxu0 %v336
    %v484 = vpop.f32.mrf.mxu0
    %v485 = vadd.f32 0.0, %v484
    %v486 = vpop.f32.mrf.mxu0
    %v487 = vpop.f32.mrf.mxu0
    %v488 = vadd.f32 0.0, %v487
    %v489 = vpop.f32.mrf.mxu0
    %490 = vmatprep.mubr.bf16.mxu0 0
    %491 = vmatmul.mubr.bf16.gmra.mxu0 %v337
    %v492 = vpop.f32.mrf.mxu0
    %v493 = vadd.f32 0.0, %v492
    %v494 = vpop.f32.mrf.mxu0
    %v495 = vpop.f32.mrf.mxu0
    %v496 = vadd.f32 0.0, %v495
    %v497 = vpop.f32.mrf.mxu0
    %498 = vdwg.mxu0
    %v499 = vpack.c.bf16 %v440, %v437
    %v500 = vpack.c.bf16 %v448, %v445
    %v501 = vpack.c.bf16 %v456, %v453
    %v502 = vpack.c.bf16 %v464, %v461
    %v503 = vpack.c.bf16 %v472, %v469
    %v504 = vpack.c.bf16 %v480, %v477
    %v505 = vpack.c.bf16 %v488, %v485
    %v506 = vpack.c.bf16 %v496, %v493
    %v515 = vunpack.c.l.b16 %v499
    %v516 = vunpack.c.h.b16 %v499
    %v517 = vunpack.c.l.b16 %v500
    %v518 = vunpack.c.h.b16 %v500
    %v519 = vunpack.c.l.b16 %v501
    %v520 = vunpack.c.h.b16 %v501
    %v521 = vunpack.c.l.b16 %v502
    %v522 = vunpack.c.h.b16 %v502
    %v523 = vunpack.c.l.b16 %v503
    %v524 = vunpack.c.h.b16 %v503
    %v525 = vunpack.c.l.b16 %v504
    %v526 = vunpack.c.h.b16 %v504
    %v527 = vunpack.c.l.b16 %v505
    %v528 = vunpack.c.h.b16 %v505
    %v529 = vunpack.c.l.b16 %v506
    %v530 = vunpack.c.h.b16 %v506
    %v531 = vpack.c.b16 %v515, %v515
    %v532 = vpack.c.b16 %v516, %v516
    %v533 = vpack.c.b16 %v517, %v517
    %v534 = vpack.c.b16 %v518, %v518
    %v535 = vpack.c.b16 %v519, %v519
    %v536 = vpack.c.b16 %v520, %v520
    %v537 = vpack.c.b16 %v521, %v521
    %v538 = vpack.c.b16 %v522, %v522
    %v539 = vpack.c.b16 %v523, %v523
    %v540 = vpack.c.b16 %v524, %v524
    %v541 = vpack.c.b16 %v525, %v525
    %v542 = vpack.c.b16 %v526, %v526
    %v543 = vpack.c.b16 %v527, %v527
    %v544 = vpack.c.b16 %v528, %v528
    %v545 = vpack.c.b16 %v529, %v529
    %v546 = vpack.c.b16 %v530, %v530
    %563 = vst [vmem:[%s3] sm:$0xf] %v531
    %564 = vst [vmem:[%s3 + $0x4] sm:$0xf] %v532
    %565 = vst [vmem:[%s3 + $0x8] sm:$0xf] %v533
    %566 = vst [vmem:[%s3 + $0xc] sm:$0xf] %v534
    %567 = vst [vmem:[%s3 + $0x10] sm:$0xf] %v535
    %568 = vst [vmem:[%s3 + $0x14] sm:$0xf] %v536
    %569 = vst [vmem:[%s3 + $0x18] sm:$0xf] %v537
    %570 = vst [vmem:[%s3 + $0x1c] sm:$0xf] %v538
    %571 = vst [vmem:[%s3 + $0x20] sm:$0xf] %v539
    %572 = vst [vmem:[%s3 + $0x24] sm:$0xf] %v540
    %573 = vst [vmem:[%s3 + $0x28] sm:$0xf] %v541
    %574 = vst [vmem:[%s3 + $0x2c] sm:$0xf] %v542
    %575 = vst [vmem:[%s3 + $0x30] sm:$0xf] %v543
    %576 = vst [vmem:[%s3 + $0x34] sm:$0xf] %v544
    %577 = vst [vmem:[%s3 + $0x38] sm:$0xf] %v545
    %578 = vst [vmem:[%s3 + $0x3c] sm:$0xf] %v546
    %v579 = vadd.f32 %v437, %v440
    %v580 = vadd.f32 %v579, %v445
    %v581 = vadd.f32 %v580, %v448
    %v582 = vadd.f32 %v581, %v453
    %v583 = vadd.f32 %v582, %v456
    %v584 = vadd.f32 %v583, %v461
    %v585 = vadd.f32 %v584, %v464
    %v586 = vadd.f32 %v585, %v469
    %v587 = vadd.f32 %v586, %v472
    %v588 = vadd.f32 %v587, %v477
    %v589 = vadd.f32 %v588, %v480
    %v590 = vadd.f32 %v589, %v485
    %v591 = vadd.f32 %v590, %v488
    %v592 = vadd.f32 %v591, %v493
    %v593 = vadd.f32 %v592, %v496
    %v594 = vrot.slane %v593, 4
    %v595 = vadd.f32 %v593, %v594
    %v596 = vrot.slane %v595, 2
    %v597 = vadd.f32 %v595, %v596
    %v598 = vrot.slane %v597, 1
    %v599 = vadd.f32 %v597, %v598
    %v600 = vmul.f32 %v437, %v437
    %v601 = vmul.f32 %v440, %v440
    %v602 = vmul.f32 %v445, %v445
    %v603 = vmul.f32 %v448, %v448
    %v604 = vmul.f32 %v453, %v453
    %v605 = vmul.f32 %v456, %v456
    %v606 = vmul.f32 %v461, %v461
    %v607 = vmul.f32 %v464, %v464
    %v608 = vmul.f32 %v469, %v469
    %v609 = vmul.f32 %v472, %v472
    %v610 = vmul.f32 %v477, %v477
    %v611 = vmul.f32 %v480, %v480
    %v612 = vmul.f32 %v485, %v485
    %v613 = vmul.f32 %v488, %v488
    %v614 = vmul.f32 %v493, %v493
    %v615 = vmul.f32 %v496, %v496
    %v616 = vadd.f32 %v600, %v601
    %v617 = vadd.f32 %v616, %v602
    %v618 = vadd.f32 %v617, %v603
    %v619 = vadd.f32 %v618, %v604
    %v620 = vadd.f32 %v619, %v605
    %v621 = vadd.f32 %v620, %v606
    %v622 = vadd.f32 %v621, %v607
    %v623 = vadd.f32 %v622, %v608
    %v624 = vadd.f32 %v623, %v609
    %v625 = vadd.f32 %v624, %v610
    %v626 = vadd.f32 %v625, %v611
    %v627 = vadd.f32 %v626, %v612
    %v628 = vadd.f32 %v627, %v613
    %v629 = vadd.f32 %v628, %v614
    %v630 = vadd.f32 %v629, %v615
    %v631 = vrot.slane %v630, 4
    %v632 = vadd.f32 %v630, %v631
    %v633 = vrot.slane %v632, 2
    %v634 = vadd.f32 %v632, %v633
    %v635 = vrot.slane %v634, 1
    %v636 = vadd.f32 %v634, %v635
    %v637 = vlaneseq
    %v638 = vshrl.u32 %v637, 7
    %vm639 = vcmp.eq.s32.totalorder %v638, 0
    %v640 = vsel %vm639, %v599, 0.0
    %641 = vst [vmem:[%s4] sm:$0xff] %v640
    %v642 = vsel %vm639, %v636, 0.0
    %643 = vst [vmem:[%s5] sm:$0xff] %v642
  $region21: #{gcn_layer.2} parent=0 // pred_fallthru
    _
  // Predicated region
  $region22: #{gcn_layer.2} parent=0 // pred_check
    _
  $region23: #{gcn_layer.2} parent=0 // pred_check_branch
    %645 = sbr.rel (0) target = $region25
  $region24: #{gcn_layer.2} parent=0 // pred_region
    _
  $region25: #{gcn_layer.2} parent=0 // pred_fallthru
    _
  // Predicated region
  $region26: #{gcn_layer.2} parent=0 // pred_check
    _
  $region27: #{gcn_layer.2} parent=0 // pred_check_branch
    %647 = sbr.rel (0) target = $region29
  $region28: #{gcn_layer.2} parent=0 // pred_region
    _
  $region29: #{gcn_layer.2} parent=0 // pred_fallthru
    _
  // Predicated region
  $region30: #{gcn_layer.2} parent=0 // pred_check
    _
  $region31: #{gcn_layer.2} parent=0 // pred_check_branch
    %649 = sbr.rel (0) target = $region33
  $region32: #{gcn_layer.2} parent=0 // pred_region
    _
  $region33: #{gcn_layer.2} parent=0 // pred_fallthru
    _
  // Predicated region
  $region34: #{gcn_layer.2} parent=0 // pred_check
    _
  $region35: #{gcn_layer.2} parent=0 // pred_check_branch
    %651 = sbr.rel (0) target = $region37
  $region36: #{gcn_layer.2} parent=0 // pred_region
    _
  $region37: #{gcn_layer.2} parent=0 // pred_fallthru
    _
  // Predicated region
  $region38: #{gcn_layer.2} parent=0 // pred_check
    _
  $region39: #{gcn_layer.2} parent=0 // pred_check_branch
    %653 = sbr.rel (0) target = $region41
  $region40: #{gcn_layer.2} parent=0 // pred_region
    _
  $region41: #{gcn_layer.2} parent=0 // pred_fallthru
    _
  // Predicated region
  $region42: #{gcn_layer.2} parent=0 // pred_check
    _
  $region43: #{gcn_layer.2} parent=0 // pred_check_branch
    %655 = sbr.rel (0) target = $region45
  $region44: #{gcn_layer.2} parent=0 // pred_region
    _
  $region45: #{gcn_layer.2} parent=0 // pred_fallthru
    _

</llo_original>
